<compile_context>
chip_gen: v6e
topology: v6e:2x2x1
jax: 0.10.0
libtpu: 0.0.40
codegen_flags: <defaults>
</compile_context>

<pallas_src>
import functools

import jax
import jax.numpy as jnp
from jax.experimental import pallas as pl
from jax.experimental.pallas import tpu as pltpu


def _round_up(v, m):
    return ((v + m - 1) // m) * m


def _proposal_kernel(x_ref, w1_ref, b1_ref, w2_ref, b2_ref, prior_ref, out_ref,
                     *, k):
    # ---- EmbeddingFeedForward: Linear -> ReLU -> Linear (no last activation) ----
    h = jnp.dot(x_ref[...], w1_ref[...],
                preferred_element_type=jnp.float32) + b1_ref[...]
    h = jnp.maximum(h, 0.0)
    y = jnp.dot(h.astype(w2_ref.dtype), w2_ref[...],
                preferred_element_type=jnp.float32) + b2_ref[...]
    # y: (TB, OUTp); lanes [0,K)=means head, [K,2K)=stddevs head,
    # [2K,3K)=coefficient head, [3K,OUTp)=zero padding.

    lanes = jax.lax.broadcasted_iota(jnp.int32, y.shape, dimension=1)
    coeff_mask = (lanes >= 2 * k) & (lanes < 3 * k)

    # Masked max over the coefficient lanes only (padding excluded).
    c_max = jnp.max(jnp.where(coeff_mask, y, -1e30), axis=1, keepdims=True)

    # Single fused exp pass over all lanes:
    #   coeff lanes -> exp(y - max)   (softmax numerator)
    #   other lanes -> exp(-y)        (feeds the sigmoid)
    e = jnp.exp(jnp.where(coeff_mask, y - c_max, -y))
    sig = 1.0 / (1.0 + e)                       # valid on mean/stddev lanes
    c_exp = jnp.where(coeff_mask, e, 0.0)
    # Exact normalizer so mixture coefficients sum to 1.
    c_soft = c_exp / jnp.sum(c_exp, axis=1, keepdims=True)

    # ---- map the heads onto the Uniform prior support ----
    prior = prior_ref[...]                      # (TB, 2) = [low, high - low]
    low = prior[:, 0:1]
    rng = prior[:, 1:2]
    means = low + sig * rng
    stddevs = rng / 1000.0 + sig * rng * 10.0

    # Single lane-dense store of the fused (TB, OUTp) slab.
    out_ref[...] = jnp.where(lanes < k, means,
                             jnp.where(lanes < 2 * k, stddevs, c_soft))


def prepare_proposal_params(w1, b1, w2, b2, mixture_components=10,
                            param_dtype=jnp.float32):
    """One-time pad/cast of the MLP parameters (hoisted out of the per-call path).

    hp is aligned to 16 (covers bf16 sublane packing if param_dtype=bf16);
    the output feature dim is padded to a full 128-lane vreg so the kernel's
    output tile is written with unmasked lane-dense stores.  Zero padding is
    numerically inert through ReLU and the masked softmax.
    """
    k = mixture_components
    d_in, h_dim = w1.shape
    out_dim = 3 * k
    assert w2.shape == (h_dim, out_dim)
    hp = _round_up(h_dim, 16)
    outp = _round_up(out_dim, 128)
    w1p = jnp.pad(w1.astype(param_dtype), ((0, 0), (0, hp - h_dim)))
    b1p = jnp.pad(b1.astype(jnp.float32).reshape(1, h_dim),
                  ((0, 0), (0, hp - h_dim)))
    w2p = jnp.pad(w2.astype(param_dtype),
                  ((0, hp - h_dim), (0, outp - out_dim)))
    b2p = jnp.pad(b2.astype(jnp.float32).reshape(1, out_dim),
                  ((0, 0), (0, outp - out_dim)))
    return w1p, b1p, w2p, b2p


@functools.partial(jax.jit,
                   static_argnames=("mixture_components", "block_batch"))
def proposal_uniform_truncated_normal_mixture(x, prior_lows, prior_highs,
                                              w1p, b1p, w2p, b2p,
                                              mixture_components=10,
                                              block_batch=4096):
    """Forward pass. Returns (means, stddevs, coeffs), each (B, K) float32 --
    exactly the parameters the PyTorch module feeds into TruncatedNormal/Mixture."""
    B = x.shape[0]
    K = mixture_components
    x2d = x.reshape(B, -1)                      # PyTorch's x.view(B, -1)
    d_in = x2d.shape[1]
    hp = w1p.shape[1]
    outp = w2p.shape[1]
    assert w1p.shape[0] == d_in and w2p.shape[0] == hp

    x2d = x2d.astype(w1p.dtype)
    in_itemsize = jnp.dtype(w1p.dtype).itemsize

    # ---- batch tiling ----
    # Aim for 2 grid steps so both v7x TensorCores get work via "parallel"
    # (one near-free extra step on single-TC v5e/v6e), then cap by block_batch
    # and a conservative VMEM budget for streamed operands + live temporaries.
    bp0 = _round_up(B, 16)
    row_bytes = (2 * (d_in * in_itemsize + 2 * 4 + outp * 4)   # dbl-buffered x, priors, out
                 + hp * 4 + 6 * outp * 4)                      # live f32 temporaries
    vmem_budget = 12 << 20
    tb_budget = max(16, (vmem_budget // row_bytes) // 16 * 16)
    tb = _round_up(pl.cdiv(bp0, 2), 16) if bp0 > 16 else 16
    tb = max(16, min(tb, _round_up(block_batch, 16), tb_budget))
    bp = _round_up(bp0, tb)

    # ---- streamed operands ----
    lows = prior_lows.reshape(B).astype(jnp.float32)
    highs = prior_highs.reshape(B).astype(jnp.float32)
    priors = jnp.stack([lows, highs - lows], axis=1)           # (B, 2) = [low, range]
    xp = jnp.pad(x2d, ((0, bp - B), (0, 0)))
    priorsp = jnp.pad(priors, ((0, bp - B), (0, 0)))

    kernel = functools.partial(_proposal_kernel, k=K)
    out = pl.pallas_call(
        kernel,
        out_shape=jax.ShapeDtypeStruct((bp, outp), jnp.float32),
        grid=(bp // tb,),
        in_specs=[
            pl.BlockSpec((tb, d_in), lambda i: (i, 0)),    # x tile (pipelined)
            pl.BlockSpec((d_in, hp), lambda i: (0, 0)),    # w1 (VMEM-resident)
            pl.BlockSpec((1, hp), lambda i: (0, 0)),       # b1 (VMEM-resident)
            pl.BlockSpec((hp, outp), lambda i: (0, 0)),    # w2 (VMEM-resident)
            pl.BlockSpec((1, outp), lambda i: (0, 0)),     # b2 (VMEM-resident)
            pl.BlockSpec((tb, 2), lambda i: (i, 0)),       # [low, range] tile
        ],
        out_specs=pl.BlockSpec((tb, outp), lambda i: (i, 0)),
        compiler_params=pltpu.CompilerParams(
            dimension_semantics=("parallel",),
            vmem_limit_bytes=32 << 20),
    )(xp, w1p, b1p, w2p, b2p, priorsp)

    out = out[:B]                               # drop batch padding (free slice)
    means = out[:, :K]
    stddevs = out[:, K:2 * K]
    coeffs = out[:, 2 * K:3 * K]
    return means, stddevs, coeffs


def _reference(x, w1, b1, w2, b2, lows, highs, K):
    """Pure-JAX f32 reference of the same math (mirrors the PyTorch module)."""
    B = x.shape[0]
    x2d = x.reshape(B, -1)
    h = jnp.maximum(jnp.dot(x2d, w1) + b1, 0.0)
    y = jnp.dot(h, w2) + b2
    m = jax.nn.sigmoid(y[:, :K])
    s = jax.nn.sigmoid(y[:, K:2 * K])
    c = jax.nn.softmax(y[:, 2 * K:], axis=1)
    low = lows.reshape(B, 1)
    rng = highs.reshape(B, 1) - low
    means = low + m * rng
    stddevs = rng / 1000.0 + s * rng * 10.0
    return means, stddevs, c


if __name__ == "__main__":
    key = jax.random.PRNGKey(0)
    k_x, k_w1, k_b1, k_w2, k_b2, k_low, k_rng = jax.random.split(key, 7)

    # Module config (synthetic deterministic init): input_shape=[16], num_layers=2, K=10.
    B = 32
    D_in = 16
    K = 10
    out_dim = 3 * K
    hidden = (D_in + out_dim) // 2      # pyprob EmbeddingFeedForward default hidden dim (=23)

    x = jax.random.normal(k_x, (B, D_in), dtype=jnp.float32)
    w1 = jax.random.normal(k_w1, (D_in, hidden), dtype=jnp.float32) * 0.1
    b1 = jax.random.normal(k_b1, (hidden,), dtype=jnp.float32) * 0.1
    w2 = jax.random.normal(k_w2, (hidden, out_dim), dtype=jnp.float32) * 0.1
    b2 = jax.random.normal(k_b2, (out_dim,), dtype=jnp.float32) * 0.1

    # Per-trace Uniform prior supports (lows < highs), mimicking prior_variables.
    prior_lows = jax.random.uniform(k_low, (B,), minval=-2.0, maxval=0.0)
    prior_highs = prior_lows + jax.random.uniform(k_rng, (B,), minval=0.5, maxval=3.0)

    # One-time parameter pad/cast (hoisted out of the per-call path).
    w1p, b1p, w2p, b2p = prepare_proposal_params(w1, b1, w2, b2,
                                                 mixture_components=K)

    means, stddevs, coeffs = proposal_uniform_truncated_normal_mixture(
        x, prior_lows, prior_highs, w1p, b1p, w2p, b2p, mixture_components=K)
    jax.block_until_ready((means, stddevs, coeffs))

    # Sanity check against a pure-JAX reference of the same math.
    rm, rs, rc = _reference(x, w1, b1, w2, b2, prior_lows, prior_highs, K)
    assert means.shape == (B, K) and stddevs.shape == (B, K) and coeffs.shape == (B, K)
    assert jnp.allclose(means, rm, rtol=1e-4, atol=1e-5)
    assert jnp.allclose(stddevs, rs, rtol=1e-4, atol=1e-5)
    assert jnp.allclose(coeffs, rc, rtol=1e-4, atol=1e-5)
    assert jnp.allclose(jnp.sum(coeffs, axis=1), 1.0, atol=1e-5)

    # TODO(synk): TruncatedNormal / Mixture distribution objects (sampling, log_prob)
    # returned by the PyTorch module have no kernel equivalent; we return their
    # parameters (means, stddevs, coeffs).
    print("KERNEL_OK")
</pallas_src>

<mosaic_0001>
module attributes {stable_mosaic.version = 11 : i64} {
  func.func @_proposal_kernel(%arg0: i32, %arg1: memref<16x16xf32, #tpu.memory_space<vmem>>, %arg2: memref<16x32xf32, #tpu.memory_space<vmem>>, %arg3: memref<1x32xf32, #tpu.memory_space<vmem>>, %arg4: memref<32x128xf32, #tpu.memory_space<vmem>>, %arg5: memref<1x128xf32, #tpu.memory_space<vmem>>, %arg6: memref<16x2xf32, #tpu.memory_space<vmem>>, %arg7: memref<16x128xf32, #tpu.memory_space<vmem>>) attributes {dimension_semantics = [#tpu.dimension_semantics<parallel>], iteration_bounds = array<i64: 2>, scalar_prefetch = 0 : i64, scratch_operands = 0 : i64, tpu.core_type = #tpu.core_type<tc>, window_params = [{transform_indices = @transform_0, window_bounds = array<i64: 16, 16>}, {pipeline_mode = #tpu.pipeline_mode<synchronous>, transform_indices = @transform_1, window_bounds = array<i64: 16, 32>}, {pipeline_mode = #tpu.pipeline_mode<synchronous>, transform_indices = @transform_2, window_bounds = array<i64: 1, 32>}, {pipeline_mode = #tpu.pipeline_mode<synchronous>, transform_indices = @transform_3, window_bounds = array<i64: 32, 128>}, {pipeline_mode = #tpu.pipeline_mode<synchronous>, transform_indices = @transform_4, window_bounds = array<i64: 1, 128>}, {transform_indices = @transform_5, window_bounds = array<i64: 16, 2>}, {transform_indices = @transform_6, window_bounds = array<i64: 16, 128>}]} {
    %c0 = arith.constant 0 : index
    %c0_0 = arith.constant 0 : index
    %0 = vector.load %arg1[%c0, %c0_0] : memref<16x16xf32, #tpu.memory_space<vmem>>, vector<16x16xf32>
    %c0_1 = arith.constant 0 : index
    %c0_2 = arith.constant 0 : index
    %1 = vector.load %arg2[%c0_1, %c0_2] : memref<16x32xf32, #tpu.memory_space<vmem>>, vector<16x32xf32>
    %cst = arith.constant dense<0.000000e+00> : vector<16x32xf32>
    %2 = tpu.matmul %0, %1, %cst {dimension_numbers = #tpu.dot_dimension_numbers<[1], [0], [0], [1], [0, 0, 1, 1], [], []>} : vector<16x16xf32>, vector<16x32xf32>, vector<16x32xf32> -> vector<16x32xf32>
    %c0_3 = arith.constant 0 : index
    %c0_4 = arith.constant 0 : index
    %3 = vector.load %arg3[%c0_3, %c0_4] : memref<1x32xf32, #tpu.memory_space<vmem>>, vector<1x32xf32>
    %4 = vector.broadcast %3 : vector<1x32xf32> to vector<16x32xf32>
    %5 = arith.addf %2, %4 : vector<16x32xf32>
    %cst_5 = arith.constant 0.000000e+00 : f32
    %6 = vector.broadcast %cst_5 : f32 to vector<16x32xf32>
    %7 = arith.maximumf %5, %6 : vector<16x32xf32>
    %c0_6 = arith.constant 0 : index
    %c0_7 = arith.constant 0 : index
    %8 = vector.load %arg4[%c0_6, %c0_7] : memref<32x128xf32, #tpu.memory_space<vmem>>, vector<32x128xf32>
    %cst_8 = arith.constant dense<0.000000e+00> : vector<16x128xf32>
    %9 = tpu.matmul %7, %8, %cst_8 {dimension_numbers = #tpu.dot_dimension_numbers<[1], [0], [0], [1], [0, 0, 1, 1], [], []>} : vector<16x32xf32>, vector<32x128xf32>, vector<16x128xf32> -> vector<16x128xf32>
    %c0_9 = arith.constant 0 : index
    %c0_10 = arith.constant 0 : index
    %10 = vector.load %arg5[%c0_9, %c0_10] : memref<1x128xf32, #tpu.memory_space<vmem>>, vector<1x128xf32>
    %11 = vector.broadcast %10 : vector<1x128xf32> to vector<16x128xf32>
    %12 = arith.addf %9, %11 : vector<16x128xf32>
    %13 = tpu.iota {dimensions = array<i32: 1>} : vector<16x128xi32>
    %c20_i32 = arith.constant 20 : i32
    %14 = vector.broadcast %c20_i32 : i32 to vector<16x128xi32>
    %15 = arith.cmpi sge, %13, %14 : vector<16x128xi32>
    %c30_i32 = arith.constant 30 : i32
    %16 = vector.broadcast %c30_i32 : i32 to vector<16x128xi32>
    %17 = arith.cmpi slt, %13, %16 : vector<16x128xi32>
    %18 = arith.andi %15, %17 : vector<16x128xi1>
    %cst_11 = arith.constant -1.000000e+30 : f32
    %19 = vector.broadcast %cst_11 : f32 to vector<16x128xf32>
    %20 = arith.select %18, %12, %19 : vector<16x128xi1>, vector<16x128xf32>
    %cst_12 = arith.constant dense<0xFF800000> : vector<16xf32>
    %21 = vector.multi_reduction <maximumf>, %20, %cst_12 [1] : vector<16x128xf32> to vector<16xf32>
    %22 = vector.shape_cast %21 : vector<16xf32> to vector<16x1xf32>
    %23 = vector.broadcast %22 : vector<16x1xf32> to vector<16x128xf32>
    %24 = arith.subf %12, %23 : vector<16x128xf32>
    %cst_13 = arith.constant 0.000000e+00 : f32
    %25 = vector.broadcast %cst_13 : f32 to vector<16x128xf32>
    %26 = arith.subf %25, %12 : vector<16x128xf32>
    %27 = arith.select %18, %24, %26 : vector<16x128xi1>, vector<16x128xf32>
    %28 = math.exp %27 : vector<16x128xf32>
    %cst_14 = arith.constant 1.000000e+00 : f32
    %29 = vector.broadcast %cst_14 : f32 to vector<16x128xf32>
    %30 = arith.addf %29, %28 : vector<16x128xf32>
    %cst_15 = arith.constant 1.000000e+00 : f32
    %31 = vector.broadcast %cst_15 : f32 to vector<16x128xf32>
    %32 = arith.divf %31, %30 : vector<16x128xf32>
    %cst_16 = arith.constant 0.000000e+00 : f32
    %33 = vector.broadcast %cst_16 : f32 to vector<16x128xf32>
    %34 = arith.select %18, %28, %33 : vector<16x128xi1>, vector<16x128xf32>
    %cst_17 = arith.constant dense<0.000000e+00> : vector<16xf32>
    %35 = vector.multi_reduction <add>, %34, %cst_17 [1] : vector<16x128xf32> to vector<16xf32>
    %36 = vector.shape_cast %35 : vector<16xf32> to vector<16x1xf32>
    %37 = vector.broadcast %36 : vector<16x1xf32> to vector<16x128xf32>
    %38 = arith.divf %34, %37 : vector<16x128xf32>
    %c0_18 = arith.constant 0 : index
    %c0_19 = arith.constant 0 : index
    %39 = vector.load %arg6[%c0_18, %c0_19] : memref<16x2xf32, #tpu.memory_space<vmem>>, vector<16x2xf32>
    %40 = vector.extract_strided_slice %39 {offsets = [0, 0], sizes = [16, 1], strides = [1, 1]} : vector<16x2xf32> to vector<16x1xf32>
    %41 = vector.extract_strided_slice %39 {offsets = [0, 1], sizes = [16, 1], strides = [1, 1]} : vector<16x2xf32> to vector<16x1xf32>
    %42 = vector.broadcast %41 : vector<16x1xf32> to vector<16x128xf32>
    %43 = arith.mulf %32, %42 : vector<16x128xf32>
    %44 = vector.broadcast %40 : vector<16x1xf32> to vector<16x128xf32>
    %45 = arith.addf %44, %43 : vector<16x128xf32>
    %cst_20 = arith.constant 1.000000e+03 : f32
    %46 = vector.broadcast %cst_20 : f32 to vector<16x1xf32>
    %47 = arith.divf %41, %46 : vector<16x1xf32>
    %48 = vector.broadcast %41 : vector<16x1xf32> to vector<16x128xf32>
    %49 = arith.mulf %32, %48 : vector<16x128xf32>
    %cst_21 = arith.constant 1.000000e+01 : f32
    %50 = vector.broadcast %cst_21 : f32 to vector<16x128xf32>
    %51 = arith.mulf %49, %50 : vector<16x128xf32>
    %52 = vector.broadcast %47 : vector<16x1xf32> to vector<16x128xf32>
    %53 = arith.addf %52, %51 : vector<16x128xf32>
    %c10_i32 = arith.constant 10 : i32
    %54 = vector.broadcast %c10_i32 : i32 to vector<16x128xi32>
    %55 = arith.cmpi slt, %13, %54 : vector<16x128xi32>
    %c20_i32_22 = arith.constant 20 : i32
    %56 = vector.broadcast %c20_i32_22 : i32 to vector<16x128xi32>
    %57 = arith.cmpi slt, %13, %56 : vector<16x128xi32>
    %58 = arith.select %57, %53, %38 : vector<16x128xi1>, vector<16x128xf32>
    %59 = arith.select %55, %45, %58 : vector<16x128xi1>, vector<16x128xf32>
    %c0_23 = arith.constant 0 : index
    %c0_24 = arith.constant 0 : index
    %60 = vector.load %arg7[%c0_23, %c0_24] : memref<16x128xf32, #tpu.memory_space<vmem>>, vector<16x128xf32>
    tpu.vector_store %arg7[%c0_23, %c0_24], %59 {strides = array<i32>} : memref<16x128xf32, #tpu.memory_space<vmem>>, vector<16x128xf32>,
    return
  }
  func.func @transform_0(%arg0: i32) -> (i32, i32) {
    %c0_i32 = arith.constant 0 : i32
    %c0_i32_0 = arith.constant 0 : i32
    return %arg0, %c0_i32 : i32, i32
  }
  func.func @transform_1(%arg0: i32) -> (i32, i32) {
    %c0_i32 = arith.constant 0 : i32
    %c0_i32_0 = arith.constant 0 : i32
    %c0_i32_1 = arith.constant 0 : i32
    return %c0_i32, %c0_i32_0 : i32, i32
  }
  func.func @transform_2(%arg0: i32) -> (i32, i32) {
    %c0_i32 = arith.constant 0 : i32
    %c0_i32_0 = arith.constant 0 : i32
    %c0_i32_1 = arith.constant 0 : i32
    return %c0_i32, %c0_i32_0 : i32, i32
  }
  func.func @transform_3(%arg0: i32) -> (i32, i32) {
    %c0_i32 = arith.constant 0 : i32
    %c0_i32_0 = arith.constant 0 : i32
    %c0_i32_1 = arith.constant 0 : i32
    return %c0_i32, %c0_i32_0 : i32, i32
  }
  func.func @transform_4(%arg0: i32) -> (i32, i32) {
    %c0_i32 = arith.constant 0 : i32
    %c0_i32_0 = arith.constant 0 : i32
    %c0_i32_1 = arith.constant 0 : i32
    return %c0_i32, %c0_i32_0 : i32, i32
  }
  func.func @transform_5(%arg0: i32) -> (i32, i32) {
    %c0_i32 = arith.constant 0 : i32
    %c0_i32_0 = arith.constant 0 : i32
    return %arg0, %c0_i32 : i32, i32
  }
  func.func @transform_6(%arg0: i32) -> (i32, i32) {
    %c0_i32 = arith.constant 0 : i32
    %c0_i32_0 = arith.constant 0 : i32
    return %arg0, %c0_i32 : i32, i32
  }
}

</mosaic_0001>

<llo_original>
// kernel: proposal_uniform_truncated_normal_mixture.1
$region0: #{proposal_uniform_truncated_normal_mixture.1}
  #allocation0 [shape = 'u32[]', space=smem, size = 0x4, offset = 0x4, fixed_abs, tag = 'smem constant byte address 0x4 - core index']
  #allocation1 [shape = 'u32[144,128]{1,0:T(1,128)}', space=vmem, size = 0x12000, scoped, tag = 'internal scratch']
  %s0 = inlined_call_operand.vmem [shape: f32[32,16], index: 0, kind: input, shape index: {}]
  %s1 = inlined_call_operand.vmem [shape: f32[16,32], index: 1, kind: input, shape index: {}]
  %s2 = inlined_call_operand.vmem [shape: f32[1,32], index: 2, kind: input, shape index: {}]
  %s3 = inlined_call_operand.vmem [shape: f32[32,128], index: 3, kind: input, shape index: {}]
  %s4 = inlined_call_operand.vmem [shape: f32[1,128], index: 4, kind: input, shape index: {}]
  %s5 = inlined_call_operand.vmem [shape: f32[32,2], index: 5, kind: input, shape index: {}]
  %s6 = inlined_call_operand.vmem [shape: f32[32,128], index: 6, kind: output, shape index: {}]
  %s7 = sld [smem:[#allocation0]]
  $region57: #{proposal_uniform_truncated_normal_mixture.1} parent=0
    _
  %s9 = ssub.s32 1, %s7
  %s10 = scalar_select 0, %s9, %s7
  loop: start=0, step=1, limit=4
  $region2: #{proposal_uniform_truncated_normal_mixture.1} parent=0 // loop_pre_header
    _
  $region3: #{proposal_uniform_truncated_normal_mixture.1} parent=0 // loop_header
    %s12 = sphi 0, %s16
    %p13 = scmp.ge.s32.totalorder %s12, 4
    %s22 = sphi 0, %s24
    %s25 = sphi 0, %s22
    %s26 = sphi 0, %s25
    %s42 = sphi 0, %s26
    %s46 = sphi 0, %s46
    %s48 = sphi 0, %s46
    %s49 = sphi 0, %s48
    %s63 = sphi 0, %s49
    %s67 = sphi 0, %s67
    %s69 = sphi 0, %s67
    %s70 = sphi 0, %s69
    %s84 = sphi 0, %s70
    %s88 = sphi 0, %s88
    %s90 = sphi 0, %s88
    %s91 = sphi 0, %s90
    %s105 = sphi 0, %s91
    %s109 = sphi 0, %s109
    %s111 = sphi 0, %s109
    %s112 = sphi 0, %s111
    %s126 = sphi 0, %s112
    %s132 = sphi 0, %s134
    %s135 = sphi 0, %s132
    %s136 = sphi 0, %s135
    %s152 = sphi 0, %s136
    %s158 = sphi 0, %s160
    %s161 = sphi 0, %s158
    %s162 = sphi 0, %s161
    %s178 = sphi 0, %s162
  $region4: #{proposal_uniform_truncated_normal_mixture.1} parent=0 // loop_header_branch
    %15 = sbr.rel (%p13) target = $region8
  $region5: #{proposal_uniform_truncated_normal_mixture.1} parent=0 // loop_body
    %s17 = ssub.s32 %s12, 1
    %s18 = ssub.s32 %s12, 2
    %s19 = sadd.s32 %s12, 1
    %s20 = ssub.s32 %s12, %s19
    %p21 = scmp.eq.s32.totalorder %s20, 0
    %s23 = sadd.s32 %s22, 1
    %s24 = scalar_select %p21, %s22, %s23
    %p27 = pneg %p21
    %p28 = scmp.eq.s32.totalorder %s12, 1
    %p29 = por %p27, %p28
    %p30 = scmp.ne.s32.totalorder %s22, %s25
    %p31 = scmp.eq.s32.totalorder %s12, 0
    %p32 = por %p30, %p31
    %p33 = scmp.ne.s32.totalorder %s22, %s25
    %p34 = scmp.eq.s32.totalorder %s17, 1
    %p35 = por %p33, %p34
    %p36 = scmp.ne.s32.totalorder %s25, %s26
    %p37 = scmp.eq.s32.totalorder %s17, 0
    %p38 = por %p36, %p37
    %p39 = scmp.ne.s32.totalorder %s25, %s26
    %p40 = scmp.eq.s32.totalorder %s18, 1
    %p41 = por %p39, %p40
    %p43 = scmp.ne.s32.totalorder %s26, %s42
    %p44 = scmp.eq.s32.totalorder %s18, 0
    %p45 = por %p43, %p44
    %s47 = sadd.s32 %s46, 1
    %p50 = scmp.eq.s32.totalorder %s12, 1
    %p51 = scmp.ne.s32.totalorder %s46, %s48
    %p52 = scmp.eq.s32.totalorder %s12, 0
    %p53 = por %p51, %p52
    %p54 = scmp.ne.s32.totalorder %s46, %s48
    %p55 = scmp.eq.s32.totalorder %s17, 1
    %p56 = por %p54, %p55
    %p57 = scmp.ne.s32.totalorder %s48, %s49
    %p58 = scmp.eq.s32.totalorder %s17, 0
    %p59 = por %p57, %p58
    %p60 = scmp.ne.s32.totalorder %s48, %s49
    %p61 = scmp.eq.s32.totalorder %s18, 1
    %p62 = por %p60, %p61
    %p64 = scmp.ne.s32.totalorder %s49, %s63
    %p65 = scmp.eq.s32.totalorder %s18, 0
    %p66 = por %p64, %p65
    %s68 = sadd.s32 %s67, 1
    %p71 = scmp.eq.s32.totalorder %s12, 1
    %p72 = scmp.ne.s32.totalorder %s67, %s69
    %p73 = scmp.eq.s32.totalorder %s12, 0
    %p74 = por %p72, %p73
    %p75 = scmp.ne.s32.totalorder %s67, %s69
    %p76 = scmp.eq.s32.totalorder %s17, 1
    %p77 = por %p75, %p76
    %p78 = scmp.ne.s32.totalorder %s69, %s70
    %p79 = scmp.eq.s32.totalorder %s17, 0
    %p80 = por %p78, %p79
    %p81 = scmp.ne.s32.totalorder %s69, %s70
    %p82 = scmp.eq.s32.totalorder %s18, 1
    %p83 = por %p81, %p82
    %p85 = scmp.ne.s32.totalorder %s70, %s84
    %p86 = scmp.eq.s32.totalorder %s18, 0
    %p87 = por %p85, %p86
    %s89 = sadd.s32 %s88, 1
    %p92 = scmp.eq.s32.totalorder %s12, 1
    %p93 = scmp.ne.s32.totalorder %s88, %s90
    %p94 = scmp.eq.s32.totalorder %s12, 0
    %p95 = por %p93, %p94
    %p96 = scmp.ne.s32.totalorder %s88, %s90
    %p97 = scmp.eq.s32.totalorder %s17, 1
    %p98 = por %p96, %p97
    %p99 = scmp.ne.s32.totalorder %s90, %s91
    %p100 = scmp.eq.s32.totalorder %s17, 0
    %p101 = por %p99, %p100
    %p102 = scmp.ne.s32.totalorder %s90, %s91
    %p103 = scmp.eq.s32.totalorder %s18, 1
    %p104 = por %p102, %p103
    %p106 = scmp.ne.s32.totalorder %s91, %s105
    %p107 = scmp.eq.s32.totalorder %s18, 0
    %p108 = por %p106, %p107
    %s110 = sadd.s32 %s109, 1
    %p113 = scmp.eq.s32.totalorder %s12, 1
    %p114 = scmp.ne.s32.totalorder %s109, %s111
    %p115 = scmp.eq.s32.totalorder %s12, 0
    %p116 = por %p114, %p115
    %p117 = scmp.ne.s32.totalorder %s109, %s111
    %p118 = scmp.eq.s32.totalorder %s17, 1
    %p119 = por %p117, %p118
    %p120 = scmp.ne.s32.totalorder %s111, %s112
    %p121 = scmp.eq.s32.totalorder %s17, 0
    %p122 = por %p120, %p121
    %p123 = scmp.ne.s32.totalorder %s111, %s112
    %p124 = scmp.eq.s32.totalorder %s18, 1
    %p125 = por %p123, %p124
    %p127 = scmp.ne.s32.totalorder %s112, %s126
    %p128 = scmp.eq.s32.totalorder %s18, 0
    %p129 = por %p127, %p128
    %s130 = ssub.s32 %s12, %s19
    %p131 = scmp.eq.s32.totalorder %s130, 0
    %s133 = sadd.s32 %s132, 1
    %s134 = scalar_select %p131, %s132, %s133
    %p137 = pneg %p131
    %p138 = scmp.eq.s32.totalorder %s12, 1
    %p139 = por %p137, %p138
    %p140 = scmp.ne.s32.totalorder %s132, %s135
    %p141 = scmp.eq.s32.totalorder %s12, 0
    %p142 = por %p140, %p141
    %p143 = scmp.ne.s32.totalorder %s132, %s135
    %p144 = scmp.eq.s32.totalorder %s17, 1
    %p145 = por %p143, %p144
    %p146 = scmp.ne.s32.totalorder %s135, %s136
    %p147 = scmp.eq.s32.totalorder %s17, 0
    %p148 = por %p146, %p147
    %p149 = scmp.ne.s32.totalorder %s135, %s136
    %p150 = scmp.eq.s32.totalorder %s18, 1
    %p151 = por %p149, %p150
    %p153 = scmp.ne.s32.totalorder %s136, %s152
    %p154 = scmp.eq.s32.totalorder %s18, 0
    %p155 = por %p153, %p154
    %s156 = ssub.s32 %s12, %s19
    %p157 = scmp.eq.s32.totalorder %s156, 0
    %s159 = sadd.s32 %s158, 1
    %s160 = scalar_select %p157, %s158, %s159
    %p163 = pneg %p157
    %p164 = scmp.eq.s32.totalorder %s12, 1
    %p165 = por %p163, %p164
    %p166 = scmp.ne.s32.totalorder %s158, %s161
    %p167 = scmp.eq.s32.totalorder %s12, 0
    %p168 = por %p166, %p167
    %p169 = scmp.ne.s32.totalorder %s158, %s161
    %p170 = scmp.eq.s32.totalorder %s17, 1
    %p171 = por %p169, %p170
    %p172 = scmp.ne.s32.totalorder %s161, %s162
    %p173 = scmp.eq.s32.totalorder %s17, 0
    %p174 = por %p172, %p173
    %p175 = scmp.ne.s32.totalorder %s161, %s162
    %p176 = scmp.eq.s32.totalorder %s18, 1
    %p177 = por %p175, %p176
    %p179 = scmp.ne.s32.totalorder %s162, %s178
    %p180 = scmp.eq.s32.totalorder %s18, 0
    %p181 = por %p179, %p180
    %p182 = scmp.le.s32.totalorder 1, %s12
    %p183 = scmp.lt.s32.totalorder %s12, 3
    %p184 = pnand %p182, %p183
    %p185 = pneg %p184
    // Predicated region
    $region9: #{proposal_uniform_truncated_normal_mixture.1} parent=5 // pred_check
      _
    $region10: #{proposal_uniform_truncated_normal_mixture.1} parent=5 // pred_check_branch
      %187 = sbr.rel (%p184) target = $region12
    $region11: #{proposal_uniform_truncated_normal_mixture.1} parent=5 // pred_region
      %s188 = ssub.s32 %s12, 1
      // Predicated region
      $region13: #{proposal_uniform_truncated_normal_mixture.1} parent=11 // pred_check
        %p189 = pneg %p59
      $region14: #{proposal_uniform_truncated_normal_mixture.1} parent=11 // pred_check_branch
        %191 = sbr.rel (%p189) target = $region16
      $region15: #{proposal_uniform_truncated_normal_mixture.1} parent=11 // pred_region
        _
      $region16: #{proposal_uniform_truncated_normal_mixture.1} parent=11 // pred_fallthru
        _
      // Predicated region
      $region17: #{proposal_uniform_truncated_normal_mixture.1} parent=11 // pred_check
        %p192 = pneg %p80
      $region18: #{proposal_uniform_truncated_normal_mixture.1} parent=11 // pred_check_branch
        %194 = sbr.rel (%p192) target = $region20
      $region19: #{proposal_uniform_truncated_normal_mixture.1} parent=11 // pred_region
        _
      $region20: #{proposal_uniform_truncated_normal_mixture.1} parent=11 // pred_fallthru
        _
      // Predicated region
      $region21: #{proposal_uniform_truncated_normal_mixture.1} parent=11 // pred_check
        %p195 = pneg %p101
      $region22: #{proposal_uniform_truncated_normal_mixture.1} parent=11 // pred_check_branch
        %197 = sbr.rel (%p195) target = $region24
      $region23: #{proposal_uniform_truncated_normal_mixture.1} parent=11 // pred_region
        _
      $region24: #{proposal_uniform_truncated_normal_mixture.1} parent=11 // pred_fallthru
        _
      // Predicated region
      $region25: #{proposal_uniform_truncated_normal_mixture.1} parent=11 // pred_check
        %p198 = pneg %p122
      $region26: #{proposal_uniform_truncated_normal_mixture.1} parent=11 // pred_check_branch
        %200 = sbr.rel (%p198) target = $region28
      $region27: #{proposal_uniform_truncated_normal_mixture.1} parent=11 // pred_region
        _
      $region28: #{proposal_uniform_truncated_normal_mixture.1} parent=11 // pred_fallthru
        _
    $region12: #{proposal_uniform_truncated_normal_mixture.1} parent=5 // pred_fallthru
      _
    %p201 = scmp.lt.s32.totalorder %s12, 2
    // Predicated region
    $region29: #{proposal_uniform_truncated_normal_mixture.1} parent=5 // pred_check
      %p202 = pneg %p201
    $region30: #{proposal_uniform_truncated_normal_mixture.1} parent=5 // pred_check_branch
      %204 = sbr.rel (%p202) target = $region32
    $region31: #{proposal_uniform_truncated_normal_mixture.1} parent=5 // pred_region
      // Predicated region
      $region33: #{proposal_uniform_truncated_normal_mixture.1} parent=31 // pred_check
        %p205 = pneg %p32
      $region34: #{proposal_uniform_truncated_normal_mixture.1} parent=31 // pred_check_branch
        %207 = sbr.rel (%p205) target = $region36
      $region35: #{proposal_uniform_truncated_normal_mixture.1} parent=31 // pred_region
        %s208 = smul.u32 2, %s12
        %p209 = scmp.lt.s32.totalorder %s208, 3
        %s210 = scalar_select %p209, %s208, 3
        %s211 = smul.addr %s210, 8
        %s212 = scalar_lea.vmem %s0, %s211
        %s213 = smul.u32 2, %s12
      $region36: #{proposal_uniform_truncated_normal_mixture.1} parent=31 // pred_fallthru
        _
      // Predicated region
      $region37: #{proposal_uniform_truncated_normal_mixture.1} parent=31 // pred_check
        %p214 = pneg %p142
      $region38: #{proposal_uniform_truncated_normal_mixture.1} parent=31 // pred_check_branch
        %216 = sbr.rel (%p214) target = $region40
      $region39: #{proposal_uniform_truncated_normal_mixture.1} parent=31 // pred_region
        %s217 = smul.u32 2, %s12
        %p218 = scmp.lt.s32.totalorder %s217, 3
        %s219 = scalar_select %p218, %s217, 3
        %s220 = smul.addr %s219, 8
        %s221 = scalar_lea.vmem %s5, %s220
        %s222 = smul.u32 2, %s12
      $region40: #{proposal_uniform_truncated_normal_mixture.1} parent=31 // pred_fallthru
        _
    $region32: #{proposal_uniform_truncated_normal_mixture.1} parent=5 // pred_fallthru
      _
    %p223 = scmp.le.s32.totalorder 1, %s12
    %p224 = scmp.lt.s32.totalorder %s12, 3
    %p225 = pnand %p223, %p224
    %p226 = pneg %p225
    // Predicated region
    $region41: #{proposal_uniform_truncated_normal_mixture.1} parent=5 // pred_check
      _
    $region42: #{proposal_uniform_truncated_normal_mixture.1} parent=5 // pred_check_branch
      %228 = sbr.rel (%p225) target = $region44
    $region43: #{proposal_uniform_truncated_normal_mixture.1} parent=5 // pred_region
      %s229 = ssub.s32 %s12, 1
      %s230 = smul.u32 2, %s17
      %p231 = scmp.lt.s32.totalorder %s230, 3
      %s232 = scalar_select %p231, %s230, 3
      %s233 = smul.addr %s232, 8
      %s234 = scalar_lea.vmem %s0, %s233
      %p235 = pneg %p38
      %p236 = pneg %p35
      %p237 = pneg %p59
      %p238 = pneg %p56
      %p239 = pneg %p80
      %p240 = pneg %p77
      %p241 = pneg %p101
      %p242 = pneg %p98
      %p243 = pneg %p122
      %p244 = pneg %p119
      %s245 = smul.u32 2, %s17
      %p246 = scmp.lt.s32.totalorder %s245, 3
      %s247 = scalar_select %p246, %s245, 3
      %s248 = smul.addr %s247, 8
      %s249 = scalar_lea.vmem %s5, %s248
      %p250 = pneg %p148
      %p251 = pneg %p145
      %p252 = pneg %p174
      %p253 = pneg %p171
      %s254 = smul.u32 2, %s17
      %p255 = scmp.lt.s32.totalorder %s254, 3
      %s256 = scalar_select %p255, %s254, 3
      %s257 = smul.addr %s256, 8
      %s258 = scalar_lea.vmem %s6, %s257
      %s259 = smul.u32 2, %s17
      %p260 = scmp.lt.s32.totalorder %s259, 3
      %s261 = scalar_select %p260, %s259, 3
      %s262 = smul.addr %s261, 8
      %s263 = scalar_lea.vmem %s0, %s262
      %s264 = smul.u32 2, %s17
      %s265 = smul.u32 2, %s17
      %p266 = scmp.lt.s32.totalorder %s265, 3
      %s267 = scalar_select %p266, %s265, 3
      %s268 = smul.addr %s267, 8
      %s269 = scalar_lea.vmem %s5, %s268
      %s270 = smul.u32 2, %s17
      %s271 = smul.u32 2, %s17
      %p272 = scmp.lt.s32.totalorder %s271, 3
      %s273 = scalar_select %p272, %s271, 3
      %s274 = smul.addr %s273, 8
      %s275 = scalar_lea.vmem %s6, %s274
      %s276 = smul.u32 2, %s17
      %v277 = vld [vmem:[%s263] sm:$0xff]
      %v278 = vld [vmem:[%s263 + $0x8] sm:$0xff]
      %v279 = vld [vmem:[%s1] sm:$0xff]
      %v280 = vld [vmem:[%s1 + $0x8] sm:$0xff]
      %v281 = vld [vmem:[%s2] sm:$0x1]
      %v283 = vlaneseq
      %v284 = vshrl.u32 %v283, 7
      %v285 = vsub.s32 0, %v284
      %v286 = vrot.slane %v281, %v285
      %vm288 = vcmask 130048
      %v290 = vsel %vm288, %v277, 0
      %v293 = vsel %vm288, %v278, 0
      %295 = vmatprep.subr.mxu0 0.0
      %296 = vmatpush1.msra.mxu0 0.0
      %297 = vmatprep.subr.mxu0 0.0
      %298 = vmatpush1.msra.mxu0 0.0
      %299 = vmatprep.subr.mxu0 0.0
      %300 = vmatpush1.msra.mxu0 0.0
      %301 = vmatprep.subr.mxu0 0.0
      %302 = vmatpush1.msra.mxu0 0.0
      %303 = vmatprep.subr.mxu0 0.0
      %304 = vmatpush1.msra.mxu0 0.0
      %305 = vmatprep.subr.mxu0 0.0
      %306 = vmatpush1.msra.mxu0 0.0
      %307 = vmatprep.subr.mxu0 0.0
      %308 = vmatpush1.msra.mxu0 0.0
      %309 = vmatprep.subr.mxu0 0.0
      %310 = vmatpush1.msra.mxu0 0.0
      %311 = vmatprep.subr.mxu0 0.0
      %312 = vmatpush1.msra.mxu0 0.0
      %313 = vmatprep.subr.mxu0 0.0
      %314 = vmatpush1.msra.mxu0 0.0
      %315 = vmatprep.subr.mxu0 0.0
      %316 = vmatpush1.msra.mxu0 0.0
      %317 = vmatprep.subr.mxu0 0.0
      %318 = vmatpush1.msra.mxu0 0.0
      %319 = vmatprep.subr.mxu0 0.0
      %320 = vmatpush1.msra.mxu0 0.0
      %321 = vmatprep.subr.mxu0 0.0
      %322 = vmatpush1.msra.mxu0 0.0
      %323 = vmatprep.subr.mxu0 0.0
      %324 = vmatpush1.msra.mxu0 %v280
      %325 = vmatprep.subr.mxu0 0.0
      %326 = vmatpush1.msra.mxu0 %v279
      %327 = vmatprep.subr.mxu0 0.0
      %328 = vmatpush2.msra.mxu0 0.0
      %329 = vmatprep.subr.mxu0 0.0
      %330 = vmatpush2.msra.mxu0 0.0
      %331 = vmatprep.subr.mxu0 0.0
      %332 = vmatpush2.msra.mxu0 0.0
      %333 = vmatprep.subr.mxu0 0.0
      %334 = vmatpush2.msra.mxu0 0.0
      %335 = vmatprep.subr.mxu0 0.0
      %336 = vmatpush2.msra.mxu0 0.0
      %337 = vmatprep.subr.mxu0 0.0
      %338 = vmatpush2.msra.mxu0 0.0
      %339 = vmatprep.subr.mxu0 0.0
      %340 = vmatpush2.msra.mxu0 0.0
      %341 = vmatprep.subr.mxu0 0.0
      %342 = vmatpush2.msra.mxu0 0.0
      %343 = vmatprep.subr.mxu0 0.0
      %344 = vmatpush2.msra.mxu0 0.0
      %345 = vmatprep.subr.mxu0 0.0
      %346 = vmatpush2.msra.mxu0 0.0
      %347 = vmatprep.subr.mxu0 0.0
      %348 = vmatpush2.msra.mxu0 0.0
      %349 = vmatprep.subr.mxu0 0.0
      %350 = vmatpush2.msra.mxu0 0.0
      %351 = vmatprep.subr.mxu0 0.0
      %352 = vmatpush2.msra.mxu0 0.0
      %353 = vmatprep.subr.mxu0 0.0
      %354 = vmatpush2.msra.mxu0 0.0
      %355 = vmatprep.subr.mxu0 0.0
      %356 = vmatpush2.msra.mxu0 0.0
      %357 = vmatprep.subr.mxu0 0.0
      %358 = vmatpush2.msra.mxu0 0.0
      %359 = vmatprep.mubr.f32.mxu0 0.0
      %360 = vmatmul.mubr.f32.gmra.mxu0 %v290
      %v361 = vpop.f32.mrf.mxu0
      %v362 = vadd.f32 %v286, %v361
      %v363 = vpop.f32.mrf.mxu0
      %364 = vmatprep.mubr.f32.mxu0 0.0
      %365 = vmatmul.mubr.f32.gmra.mxu0 %v293
      %v366 = vpop.f32.mrf.mxu0
      %v367 = vadd.f32 %v286, %v366
      %v368 = vpop.f32.mrf.mxu0
      %369 = vdwg.mxu0
      %v370 = vmax.f32 %v362, 0.0
      %v371 = vmax.f32 %v367, 0.0
      %v372 = vld [vmem:[%s3] sm:$0xff]
      %v373 = vld [vmem:[%s3 + $0x8] sm:$0xff]
      %v374 = vld [vmem:[%s3 + $0x10] sm:$0xff]
      %v375 = vld [vmem:[%s3 + $0x18] sm:$0xff]
      %v376 = vld [vmem:[%s4] sm:$0x1]
      %v378 = vlaneseq
      %v379 = vshrl.u32 %v378, 7
      %v380 = vsub.s32 0, %v379
      %v381 = vrot.slane %v376, %v380
      %vm383 = vcmask 261120
      %v385 = vsel %vm383, %v370, 0
      %v388 = vsel %vm383, %v371, 0
      %390 = vmatprep.subr.mxu0 0.0
      %391 = vmatpush1.msra.mxu0 0.0
      %392 = vmatprep.subr.mxu0 0.0
      %393 = vmatpush1.msra.mxu0 0.0
      %394 = vmatprep.subr.mxu0 0.0
      %395 = vmatpush1.msra.mxu0 0.0
      %396 = vmatprep.subr.mxu0 0.0
      %397 = vmatpush1.msra.mxu0 0.0
      %398 = vmatprep.subr.mxu0 0.0
      %399 = vmatpush1.msra.mxu0 0.0
      %400 = vmatprep.subr.mxu0 0.0
      %401 = vmatpush1.msra.mxu0 0.0
      %402 = vmatprep.subr.mxu0 0.0
      %403 = vmatpush1.msra.mxu0 0.0
      %404 = vmatprep.subr.mxu0 0.0
      %405 = vmatpush1.msra.mxu0 0.0
      %406 = vmatprep.subr.mxu0 0.0
      %407 = vmatpush1.msra.mxu0 0.0
      %408 = vmatprep.subr.mxu0 0.0
      %409 = vmatpush1.msra.mxu0 0.0
      %410 = vmatprep.subr.mxu0 0.0
      %411 = vmatpush1.msra.mxu0 0.0
      %412 = vmatprep.subr.mxu0 0.0
      %413 = vmatpush1.msra.mxu0 0.0
      %414 = vmatprep.subr.mxu0 0.0
      %415 = vmatpush1.msra.mxu0 %v375
      %416 = vmatprep.subr.mxu0 0.0
      %417 = vmatpush1.msra.mxu0 %v374
      %418 = vmatprep.subr.mxu0 0.0
      %419 = vmatpush1.msra.mxu0 %v373
      %420 = vmatprep.subr.mxu0 0.0
      %421 = vmatpush1.msra.mxu0 %v372
      %422 = vmatprep.subr.mxu0 0.0
      %423 = vmatpush2.msra.mxu0 0.0
      %424 = vmatprep.subr.mxu0 0.0
      %425 = vmatpush2.msra.mxu0 0.0
      %426 = vmatprep.subr.mxu0 0.0
      %427 = vmatpush2.msra.mxu0 0.0
      %428 = vmatprep.subr.mxu0 0.0
      %429 = vmatpush2.msra.mxu0 0.0
      %430 = vmatprep.subr.mxu0 0.0
      %431 = vmatpush2.msra.mxu0 0.0
      %432 = vmatprep.subr.mxu0 0.0
      %433 = vmatpush2.msra.mxu0 0.0
      %434 = vmatprep.subr.mxu0 0.0
      %435 = vmatpush2.msra.mxu0 0.0
      %436 = vmatprep.subr.mxu0 0.0
      %437 = vmatpush2.msra.mxu0 0.0
      %438 = vmatprep.subr.mxu0 0.0
      %439 = vmatpush2.msra.mxu0 0.0
      %440 = vmatprep.subr.mxu0 0.0
      %441 = vmatpush2.msra.mxu0 0.0
      %442 = vmatprep.subr.mxu0 0.0
      %443 = vmatpush2.msra.mxu0 0.0
      %444 = vmatprep.subr.mxu0 0.0
      %445 = vmatpush2.msra.mxu0 0.0
      %446 = vmatprep.subr.mxu0 0.0
      %447 = vmatpush2.msra.mxu0 0.0
      %448 = vmatprep.subr.mxu0 0.0
      %449 = vmatpush2.msra.mxu0 0.0
      %450 = vmatprep.subr.mxu0 0.0
      %451 = vmatpush2.msra.mxu0 0.0
      %452 = vmatprep.subr.mxu0 0.0
      %453 = vmatpush2.msra.mxu0 0.0
      %454 = vmatprep.mubr.f32.mxu0 0.0
      %455 = vmatmul.mubr.f32.gmra.mxu0 %v385
      %v456 = vpop.f32.mrf.mxu0
      %v457 = vadd.f32 %v381, %v456
      %v458 = vpop.f32.mrf.mxu0
      %459 = vmatprep.mubr.f32.mxu0 0.0
      %460 = vmatmul.mubr.f32.gmra.mxu0 %v388
      %v461 = vpop.f32.mrf.mxu0
      %v462 = vadd.f32 %v381, %v461
      %v463 = vpop.f32.mrf.mxu0
      %464 = vdwg.mxu0
      %v465 = vlaneseq
      %v466 = vand.u32 %v465, 127
      %vm467 = vcmp.ge.s32.totalorder %v466, 20
      %vm468 = vcmp.lt.s32.totalorder %v466, 30
      %vm469 = vmand %vm467, %vm468
      %v470 = vsel %vm469, %v457, -1e+30
      %v471 = vsel %vm469, %v462, -1e+30
      %472 = vmax.xlane.f32.xlu0 %v470
      %v473 = vpop.xlane.xlu0 %472
      %474 = vmax.xlane.f32.xlu0 %v471
      %v475 = vpop.xlane.xlu0 %474
      %v476 = vsub.f32 %v457, %v473
      %v477 = vsub.f32 %v462, %v475
      %v478 = vsub.f32 0.0, %v457
      %v479 = vsub.f32 0.0, %v462
      %v480 = vsel %vm469, %v476, %v478
      %v481 = vsel %vm469, %v477, %v479
      %v482 = vmul.f32 %v480, 1.442695
      %v483 = vpow.pop %v482
      %v484 = vmul.f32 %v481, 1.442695
      %v485 = vpow.pop %v484
      %v486 = vadd.f32 %v483, 1.0
      %v487 = vadd.f32 %v485, 1.0
      %v488 = vrcp.pop %v486
      %v489 = vmul.f32 1.0, %v488
      %v490 = vrcp.pop %v487
      %v491 = vmul.f32 1.0, %v490
      %v492 = vsel %vm469, %v483, 0.0
      %v493 = vsel %vm469, %v485, 0.0
      %494 = vadd.xlane.f32.xlu0 %v492
      %v495 = vpop.xlane.xlu0 %494
      %496 = vadd.xlane.f32.xlu0 %v493
      %v497 = vpop.xlane.xlu0 %496
      %v498 = vrcp.pop %v495
      %v499 = vmul.f32 %v492, %v498
      %v500 = vrcp.pop %v497
      %v501 = vmul.f32 %v493, %v500
      %v502 = vld [vmem:[%s269] sm:$0xff]
      %v503 = vld [vmem:[%s269 + $0x8] sm:$0xff]
      %505 = vset.pattern.permute.xlu0 1
      %506 = vperm.xlu0 %505, %v502
      %v507 = vpop.permute.xlu0 %506
      %510 = vset.pattern.permute.xlu0 1
      %511 = vperm.xlu0 %510, %v503
      %v512 = vpop.permute.xlu0 %511
      %v514 = vmul.f32 %v489, %v507
      %v515 = vmul.f32 %v491, %v512
      %516 = vset.pattern.permute.xlu0 0
      %517 = vperm.xlu0 %516, %v502
      %v518 = vpop.permute.xlu0 %517
      %520 = vset.pattern.permute.xlu0 0
      %521 = vperm.xlu0 %520, %v503
      %v522 = vpop.permute.xlu0 %521
      %v524 = vadd.f32 %v518, %v514
      %v525 = vadd.f32 %v522, %v515
      %v526 = vrcp.pop 1000.0
      %v527 = vmul.f32 %v502, %v526
      %v528 = vmul.f32 %v503, %v526
      %v529 = vmul.f32 %v514, 10.0
      %v530 = vmul.f32 %v515, 10.0
      %532 = vset.pattern.permute.xlu0 1
      %533 = vperm.xlu0 %532, %v527
      %v534 = vpop.permute.xlu0 %533
      %537 = vset.pattern.permute.xlu0 1
      %538 = vperm.xlu0 %537, %v528
      %v539 = vpop.permute.xlu0 %538
      %v541 = vadd.f32 %v534, %v529
      %v542 = vadd.f32 %v539, %v530
      %vm543 = vcmp.lt.s32.totalorder %v466, 10
      %vm544 = vcmp.lt.s32.totalorder %v466, 20
      %v545 = vsel %vm544, %v541, %v499
      %v546 = vsel %vm544, %v542, %v501
      %v547 = vsel %vm543, %v524, %v545
      %v548 = vsel %vm543, %v525, %v546
      %549 = vst [vmem:[%s275] sm:$0xff] %v547
      %550 = vst [vmem:[%s275 + $0x8] sm:$0xff] %v548
      %s551 = smul.u32 2, %s17
      %p552 = scmp.lt.s32.totalorder %s551, 3
      %s553 = scalar_select %p552, %s551, 3
      %s554 = smul.addr %s553, 8
      %s555 = scalar_lea.vmem %s6, %s554
      // Predicated region
      $region45: #{proposal_uniform_truncated_normal_mixture.1} parent=43 // pred_check
        %p556 = pneg %p171
      $region46: #{proposal_uniform_truncated_normal_mixture.1} parent=43 // pred_check_branch
        %558 = sbr.rel (%p556) target = $region48
      $region47: #{proposal_uniform_truncated_normal_mixture.1} parent=43 // pred_region
        %s559 = smul.u32 2, %s17
      $region48: #{proposal_uniform_truncated_normal_mixture.1} parent=43 // pred_fallthru
        _
    $region44: #{proposal_uniform_truncated_normal_mixture.1} parent=5 // pred_fallthru
      _
    %p560 = scmp.le.s32.totalorder 2, %s12
    // Predicated region
    $region49: #{proposal_uniform_truncated_normal_mixture.1} parent=5 // pred_check
      %p561 = pneg %p560
    $region50: #{proposal_uniform_truncated_normal_mixture.1} parent=5 // pred_check_branch
      %563 = sbr.rel (%p561) target = $region52
    $region51: #{proposal_uniform_truncated_normal_mixture.1} parent=5 // pred_region
      %s564 = ssub.s32 %s12, 2
      // Predicated region
      $region53: #{proposal_uniform_truncated_normal_mixture.1} parent=51 // pred_check
        %p565 = pneg %p177
      $region54: #{proposal_uniform_truncated_normal_mixture.1} parent=51 // pred_check_branch
        %567 = sbr.rel (%p565) target = $region56
      $region55: #{proposal_uniform_truncated_normal_mixture.1} parent=51 // pred_region
        %s568 = smul.u32 2, %s18
        %p569 = scmp.lt.s32.totalorder %s568, 3
        %s570 = scalar_select %p569, %s568, 3
        %s571 = smul.addr %s570, 8
        %s572 = scalar_lea.vmem %s6, %s571
      $region56: #{proposal_uniform_truncated_normal_mixture.1} parent=51 // pred_fallthru
        _
    $region52: #{proposal_uniform_truncated_normal_mixture.1} parent=5 // pred_fallthru
      _
  $region6: #{proposal_uniform_truncated_normal_mixture.1} parent=0 // loop_footer
    %s16 = sadd.s32 1, %s12
  $region7: #{proposal_uniform_truncated_normal_mixture.1} parent=0 // loop_footer_branch
    %11 = sbr.rel target = $region3
  $region8: #{proposal_uniform_truncated_normal_mixture.1} parent=0 // loop_exit
    _

</llo_original>
